<compile_context>
chip_gen: v5e
topology: v5e:2x2
jax: 0.10.0
libtpu: 0.0.40
codegen_flags: <defaults>
</compile_context>

<pallas_src>
import functools
import math
import random

import jax
import jax.numpy as jnp
import numpy as np
from jax.experimental import pallas as pl
from jax.experimental.pallas import tpu as pltpu


def _select_hw_params():
    """Pick scoped-VMEM limit and matmul tile caps per TPU generation."""
    phys = 64 * 1024 * 1024
    try:
        info = pltpu.get_tpu_info()
        phys = int(getattr(info, "vmem_capacity_bytes", phys))
    except Exception:
        pass
    if phys >= 100 * 1024 * 1024:
        # v5e / v6e: 128 MiB physical VMEM -> bigger tiles, fewer grid steps.
        return min(96 * 1024 * 1024, (phys * 3) // 4), (512, 1024, 512)
    # v7x: 64 MiB physical per TensorCore -> keep tiles modest, leave pipelining room.
    return min(48 * 1024 * 1024, (phys * 3) // 4), (512, 512, 256)


VMEM_LIMIT_BYTES, (TM_CAP, TK_CAP, TN_CAP) = _select_hw_params()


def _round_up(x, m):
    return ((x + m - 1) // m) * m


def _fit(dim, base, cap):
    """Return (padded_dim, tile) with tile | padded_dim, tile <= cap, tile % base == 0."""
    d = _round_up(max(dim, base), base)
    if d <= cap:
        return d, d
    return _round_up(d, cap), cap


def _pad_to(x, shape):
    pads = [(0, s - d) for d, s in zip(x.shape, shape)]
    if all(p == (0, 0) for p in pads):
        return x
    return jnp.pad(x, pads)


def _elu(x, alpha):
    # Numerically-stable expm1: tanh(x/2) * (exp(x) + 1) == expm1(x); exact at 0
    # (so fusing past zero padding stays exact) and no cancellation near 0.
    xm = jnp.minimum(x, 0.0)
    em1 = jnp.tanh(0.5 * xm) * (jnp.exp(xm) + 1.0)
    return jnp.where(x > 0, x, alpha * em1)


# ----------------------------------------------------------------------------
# Fused matmul kernel: bf16 MXU, f32 accumulate, fused bias + optional ELU,
# configurable output dtype (bf16 by default for conv layers).
# ----------------------------------------------------------------------------

def _mm_kernel(a_ref, b_ref, bias_ref, o_ref, acc_ref, *, elu_in, elu_out, alpha):
    k = pl.program_id(2)

    @pl.when(k == 0)
    def _():
        acc_ref[...] = jnp.zeros_like(acc_ref)

    a = a_ref[...]
    if elu_in:
        # elementwise math in f32 (v5e VPU/EUP have no bf16 path), matmul in bf16
        a = _elu(a.astype(jnp.float32), alpha).astype(jnp.bfloat16)
    acc_ref[...] += jnp.dot(a, b_ref[...], preferred_element_type=jnp.float32)

    @pl.when(k == pl.num_programs(2) - 1)
    def _():
        out = acc_ref[...] + bias_ref[...]
        if elu_out:
            out = _elu(out, alpha)
        o_ref[...] = out.astype(o_ref.dtype)


def fused_matmul(a, b, bias=None, elu_in_alpha=None, elu_out_alpha=None,
                 out_dtype=jnp.float32):
    """(M,K)@(K,N) in bf16 with f32 accumulation; fuses ELU prologue + bias epilogue."""
    M, K = a.shape
    K2, N = b.shape
    assert K == K2
    a = a.astype(jnp.bfloat16)
    b = b.astype(jnp.bfloat16)

    Mp, TM = _fit(M, 16, TM_CAP)   # tall output tiles: friendlier to v5e's single vst slot
    Kp, TK = _fit(K, 128, TK_CAP)
    Np, TN = _fit(N, 128, TN_CAP)

    ap = _pad_to(a, (Mp, Kp))      # ragged-edge pad only
    bp = _pad_to(b, (Kp, Np))
    if bias is None:
        biasp = jnp.zeros((1, Np), jnp.float32)
    else:
        biasp = _pad_to(bias.astype(jnp.float32).reshape(1, N), (1, Np))

    alpha = float(elu_in_alpha if elu_in_alpha is not None
                  else (elu_out_alpha if elu_out_alpha is not None else 1.0))
    kernel = functools.partial(_mm_kernel,
                               elu_in=elu_in_alpha is not None,
                               elu_out=elu_out_alpha is not None,
                               alpha=alpha)
    out = pl.pallas_call(
        kernel,
        out_shape=jax.ShapeDtypeStruct((Mp, Np), out_dtype),
        grid_spec=pltpu.PrefetchScalarGridSpec(
            num_scalar_prefetch=0,
            grid=(Mp // TM, Np // TN, Kp // TK),
            in_specs=[pl.BlockSpec((TM, TK), lambda i, j, k: (i, k)),
                      pl.BlockSpec((TK, TN), lambda i, j, k: (k, j)),
                      pl.BlockSpec((1, TN), lambda i, j, k: (0, j))],
            out_specs=pl.BlockSpec((TM, TN), lambda i, j, k: (i, j)),
            scratch_shapes=[pltpu.VMEM((TM, TN), jnp.float32)]),
        compiler_params=pltpu.CompilerParams(
            dimension_semantics=("parallel", "parallel", "arbitrary"),
            vmem_limit_bytes=VMEM_LIMIT_BYTES),
    )(ap, bp, biasp)
    return out[:M, :N]


# ----------------------------------------------------------------------------
# Standalone ELU kernel (fallback only; in this architecture every ELU fuses
# into the following conv's prologue)
# ----------------------------------------------------------------------------

def _elu_kernel(x_ref, o_ref, *, alpha):
    o_ref[...] = _elu(x_ref[...], alpha)


def pallas_elu(x, alpha=1.0):
    shape = x.shape
    flat = x.reshape(-1).astype(jnp.float32)
    L = flat.shape[0]
    C = 512
    R = _round_up(max(1, -(-L // C)), 8)
    flat = jnp.pad(flat, (0, R * C - L))
    y = pl.pallas_call(
        functools.partial(_elu_kernel, alpha=float(alpha)),
        out_shape=jax.ShapeDtypeStruct((R, C), jnp.float32),
    )(flat.reshape(R, C))
    return y.reshape(-1)[:L].reshape(shape)


# ----------------------------------------------------------------------------
# Fully fused RVQ kernel: all n_q stages (proj_in -> nearest codeword -> dequant)
# plus in-kernel commit / L1 / L2 loss partial sums, one pallas_call.
# ----------------------------------------------------------------------------

def _rvq_all_kernel(x_ref, pinT_ref, pinb_ref, cbT_ref, cbsq_ref, deqT_ref, poutb_ref,
                    quant_ref, stats_ref, *, n_q, n_valid, d_valid):
    i = pl.program_id(0)

    @pl.when(i == 0)
    def _():
        stats_ref[...] = jnp.zeros_like(stats_ref)

    xf = x_ref[...].astype(jnp.float32)                      # (TR, Dhp)
    TR, Dhp = xf.shape
    row = jax.lax.broadcasted_iota(jnp.int32, (TR, Dhp), 0) + i * TR
    col = jax.lax.broadcasted_iota(jnp.int32, (TR, Dhp), 1)
    validf = ((row < n_valid) & (col < d_valid)).astype(jnp.float32)

    residual = xf
    q_sum = jnp.zeros_like(xf)
    commit_rows = []                                          # per-stage (1, Dhp) col-sums
    for s in range(n_q):
        rb = residual.astype(jnp.bfloat16)
        proj = jnp.dot(rb, pinT_ref[s], preferred_element_type=jnp.float32) + pinb_ref[s]
        dots = jnp.dot(proj.astype(jnp.bfloat16), cbT_ref[s],
                       preferred_element_type=jnp.float32)    # (TR, Kp)
        # ||x||^2 is constant per row -> omit; padded codewords carry a huge norm.
        dist = cbsq_ref[s] - 2.0 * dots
        kp = dist.shape[-1]
        lane = jax.lax.broadcasted_iota(jnp.int32, dist.shape, 1)
        mind = jnp.min(dist, axis=-1, keepdims=True)
        idx = jnp.min(jnp.where(dist <= mind, lane, kp), axis=-1, keepdims=True)
        onehot = (lane == idx).astype(jnp.bfloat16)
        deq = jnp.dot(onehot, deqT_ref[s], preferred_element_type=jnp.float32) + poutb_ref[s]
        diff = (deq - residual) * validf
        commit_rows.append(jnp.sum(diff * diff, axis=0, keepdims=True))
        q_sum = q_sum + deq
        residual = residual - deq

    quant_ref[...] = q_sum
    err = (q_sum - xf) * validf
    l1_cols = jnp.sum(jnp.abs(err), axis=0, keepdims=True)
    l2_cols = jnp.sum(err * err, axis=0, keepdims=True)

    R = stats_ref.shape[0]
    riota = jax.lax.broadcasted_iota(jnp.int32, (R, Dhp), 0)
    acc = jnp.zeros((R, Dhp), jnp.float32)
    for s in range(n_q):
        acc = acc + jnp.where(riota == s, commit_rows[s], 0.0)
    acc = acc + jnp.where(riota == n_q, l1_cols, 0.0)
    acc = acc + jnp.where(riota == n_q + 1, l2_cols, 0.0)
    stats_ref[...] += acc


def pallas_rvq(flat, quantizers):
    """All RVQ stages fused: residual + quantized sum stay on-chip across stages."""
    N, D = flat.shape
    n_q = len(quantizers)
    K, Dcb = quantizers[0]["codebook"].shape

    Np, TR = _fit(N, 16, 256)
    Dhp = _round_up(D, 128)
    Dcbp = _round_up(Dcb, 128)
    Kp = _round_up(K, 128)
    R = _round_up(n_q + 2, 8)

    xp = _pad_to(flat.astype(jnp.bfloat16), (Np, Dhp))
    pinT = jnp.stack([_pad_to(q["proj_in_w"].T.astype(jnp.bfloat16), (Dhp, Dcbp))
                      for q in quantizers])
    pinb = jnp.stack([_pad_to(q["proj_in_b"].astype(jnp.float32).reshape(1, Dcb), (1, Dcbp))
                      for q in quantizers])
    # Host-side pre-transpose -> plain jnp.dot in-kernel (no RHS relayout).
    cbT = jnp.stack([_pad_to(q["codebook"].T.astype(jnp.bfloat16), (Dcbp, Kp))
                     for q in quantizers])
    cbsq = jnp.stack([jnp.pad(jnp.sum(q["codebook"].astype(jnp.float32) ** 2, axis=1),
                              (0, Kp - K), constant_values=1e30).reshape(1, Kp)
                      for q in quantizers])
    # Dequant table codebook @ proj_out_w.T precomputed -> intermediate code vectors
    # never touch HBM.
    deqT = jnp.stack([_pad_to((q["codebook"] @ q["proj_out_w"].T).astype(jnp.bfloat16),
                              (Kp, Dhp)) for q in quantizers])
    poutb = jnp.stack([_pad_to(q["proj_out_b"].astype(jnp.float32).reshape(1, D), (1, Dhp))
                       for q in quantizers])

    quant, stats = pl.pallas_call(
        functools.partial(_rvq_all_kernel, n_q=n_q, n_valid=N, d_valid=D),
        out_shape=(jax.ShapeDtypeStruct((Np, Dhp), jnp.float32),
                   jax.ShapeDtypeStruct((R, Dhp), jnp.float32)),
        grid_spec=pltpu.PrefetchScalarGridSpec(
            num_scalar_prefetch=0,
            grid=(Np // TR,),
            in_specs=[pl.BlockSpec((TR, Dhp), lambda i: (i, 0)),
                      pl.BlockSpec((n_q, Dhp, Dcbp), lambda i: (0, 0, 0)),
                      pl.BlockSpec((n_q, 1, Dcbp), lambda i: (0, 0, 0)),
                      pl.BlockSpec((n_q, Dcbp, Kp), lambda i: (0, 0, 0)),
                      pl.BlockSpec((n_q, 1, Kp), lambda i: (0, 0, 0)),
                      pl.BlockSpec((n_q, Kp, Dhp), lambda i: (0, 0, 0)),
                      pl.BlockSpec((n_q, 1, Dhp), lambda i: (0, 0, 0))],
            out_specs=[pl.BlockSpec((TR, Dhp), lambda i: (i, 0)),
                       pl.BlockSpec((R, Dhp), lambda i: (0, 0))]),
        compiler_params=pltpu.CompilerParams(
            dimension_semantics=("arbitrary",),   # stats accumulate across row blocks
            vmem_limit_bytes=VMEM_LIMIT_BYTES),
    )(xp, pinT, pinb, cbT, cbsq, deqT, poutb)

    denom = float(N * D)
    commit_loss = jnp.mean(jnp.sum(stats[:n_q, :], axis=1)) / denom
    quantization_loss = (jnp.sum(stats[n_q]) + jnp.sum(stats[n_q + 1])) / denom
    return quant[:N, :D], commit_loss, quantization_loss


# ----------------------------------------------------------------------------
# In-kernel LSTM recurrence: fused 4-gate matmul, time-tiled grid, h/c in VMEM
# ----------------------------------------------------------------------------

def _lstm_kernel(gx_ref, whh_ref, y_ref, h_sc, c_sc, *, hidden):
    # gx_ref:  (TT, B, 4H) f32 (already x@W_ih.T + b_ih + b_hh, gates [i,f,g,o])
    # whh_ref: (H, 4H) bf16  == W_hh.T with the 4 gate blocks along the lane axis
    @pl.when(pl.program_id(0) == 0)
    def _():
        h_sc[...] = jnp.zeros_like(h_sc)
        c_sc[...] = jnp.zeros_like(c_sc)

    H = hidden
    TT = gx_ref.shape[0]

    def sigmoid(v):
        return 1.0 / (1.0 + jnp.exp(-v))

    def step(t, carry):
        # Single fused (B,H)@(H,4H) gate matmul per step.
        g = gx_ref[t] + jnp.dot(h_sc[...].astype(jnp.bfloat16), whh_ref[...],
                                preferred_element_type=jnp.float32)
        i_ = sigmoid(g[:, 0:H])
        f_ = sigmoid(g[:, H:2 * H])
        gg = jnp.tanh(g[:, 2 * H:3 * H])
        o_ = sigmoid(g[:, 3 * H:4 * H])
        c = f_ * c_sc[...] + i_ * gg
        h = o_ * jnp.tanh(c)
        c_sc[...] = c
        h_sc[...] = h
        y_ref[t] = h
        return carry

    jax.lax.fori_loop(0, TT, step, 0, unroll=2)


def apply_slstm(x, p):
    # SLSTM over time; features = channels * freq (freq == 1 at this stage).
    # TODO(synk): split B across v7x's two TensorCores (batch-parallel grid axis);
    # skipped here because B is tiny and must be 8-divisible to block.
    B, C, Fq, T = x.shape
    feat = C * Fq
    seq = x.transpose(3, 0, 1, 2).reshape(T, B, feat).astype(jnp.float32)
    y = seq
    for layer in p["layers"]:
        w_ih, w_hh = layer["w_ih"], layer["w_hh"]
        H = w_hh.shape[1]
        bias = layer["b_ih"] + layer["b_hh"]                 # fold both biases into gx
        gx = fused_matmul(y.reshape(T * B, y.shape[-1]), w_ih.T, bias=bias,
                          out_dtype=jnp.float32)
        gx = gx.reshape(T, B, 4 * H)
        whh_t = w_hh.T.astype(jnp.bfloat16)                  # (H, 4H)

        # Time-tiled grid bounds VMEM (gx streamed, not resident whole).
        TT = max(1, min(T, (2 * 1024 * 1024) // max(1, B * 4 * H * 4)))
        Tp = _round_up(T, TT)
        gxp = _pad_to(gx, (Tp, B, 4 * H))

        y_out = pl.pallas_call(
            functools.partial(_lstm_kernel, hidden=H),
            out_shape=jax.ShapeDtypeStruct((Tp, B, H), jnp.float32),
            grid_spec=pltpu.PrefetchScalarGridSpec(
                num_scalar_prefetch=0,
                grid=(Tp // TT,),
                in_specs=[pl.BlockSpec((TT, B, 4 * H), lambda i: (i, 0, 0)),
                          pl.BlockSpec((H, 4 * H), lambda i: (0, 0))],
                out_specs=pl.BlockSpec((TT, B, H), lambda i: (i, 0, 0)),
                scratch_shapes=[pltpu.VMEM((B, H), jnp.float32),
                                pltpu.VMEM((B, H), jnp.float32)]),
            compiler_params=pltpu.CompilerParams(
                dimension_semantics=("arbitrary",),
                vmem_limit_bytes=VMEM_LIMIT_BYTES),
        )(gxp, whh_t)
        y = y_out[:T]
    if p["skip"]:
        y = y + seq
    return y.reshape(T, B, C, Fq).transpose(1, 2, 3, 0)


# ----------------------------------------------------------------------------
# Conv / padding helpers (pad + im2col glue in JAX, fused matmul in Pallas)
# ----------------------------------------------------------------------------

def _pad_axis(x, axis, left, right, mode):
    if left == 0 and right == 0:
        return x
    pads = [(0, 0)] * x.ndim
    if mode == "reflect":
        length = x.shape[axis]
        max_pad = max(left, right)
        extra = 0
        if length <= max_pad:                       # SEANet pad1d small-input fallback
            extra = max_pad - length + 1
            pe = [(0, 0)] * x.ndim
            pe[axis] = (0, extra)
            x = jnp.pad(x, pe)
        pads[axis] = (left, right)
        x = jnp.pad(x, pads, mode="reflect")
        if extra > 0:
            x = jax.lax.slice_in_dim(x, 0, x.shape[axis] - extra, axis=axis)
        return x
    pads[axis] = (left, right)
    return jnp.pad(x, pads)


def _extra_padding(length, k_eff, stride, padding_total):
    n_frames = (length - k_eff + padding_total) / stride + 1
    ideal = (math.ceil(n_frames) - 1) * stride + (k_eff - padding_total)
    return max(0, ideal - length)


def _im2col(x, kh, kw, sh, sw, dh, dw):
    B, C, H, W = x.shape
    oh = (H - (kh - 1) * dh - 1) // sh + 1
    ow = (W - (kw - 1) * dw - 1) // sw + 1
    cols = []
    for i in range(kh):
        for j in range(kw):
            cols.append(x[:, :, i * dh:i * dh + sh * (oh - 1) + 1:sh,
                              j * dw:j * dw + sw * (ow - 1) + 1:sw])
    col = jnp.stack(cols, axis=2)                                   # (B,C,kh*kw,oh,ow)
    col = col.transpose(0, 3, 4, 1, 2).reshape(B * oh * ow, C * kh * kw)
    return col, oh, ow


def conv2d_raw(x, w, b, stride=(1, 1), dilation=(1, 1), elu_alpha=None,
               out_dtype=jnp.bfloat16):
    """Valid conv on already-padded NCHW input; fused matmul + bias (+ ELU prologue)."""
    B = x.shape[0]
    Cout, Cin, kh, kw = w.shape
    if kh == 1 and kw == 1 and stride == (1, 1) and dilation == (1, 1):
        oh, ow = x.shape[2], x.shape[3]
        col = x.transpose(0, 2, 3, 1).reshape(B * oh * ow, Cin)    # 1x1: no im2col
    else:
        # TODO(synk): kxk convs still im2col in JAX; an in-kernel shifted-window
        # gather (halo BlockSpec) would remove the kh*kw HBM expansion.
        col, oh, ow = _im2col(x, kh, kw, stride[0], stride[1], dilation[0], dilation[1])
    out = fused_matmul(col, w.reshape(Cout, Cin * kh * kw).T, bias=b,
                       elu_in_alpha=elu_alpha, out_dtype=out_dtype)
    return out.reshape(B, oh, ow, Cout).transpose(0, 3, 1, 2)


def apply_sconv2d(x, p, elu_alpha=None):
    w, b = p["w"], p["b"]
    sh, sw = p["stride"]
    dh, dw = p["dilation"]
    kh, kw = w.shape[2], w.shape[3]
    x = x.astype(jnp.bfloat16)           # halve padding/im2col/DMA bytes
    for axis, (k, s, d) in zip((2, 3), ((kh, sh, dh), (kw, sw, dw))):
        k_eff = (k - 1) * d + 1
        padding_total = k_eff - s
        extra = _extra_padding(x.shape[axis], k_eff, s, padding_total)
        pad_r = padding_total // 2
        pad_l = padding_total - pad_r
        x = _pad_axis(x, axis, pad_l, pad_r + extra, p["pad_mode"])
    # Fusing ELU after padding is exact: reflect padding copies values, zero
    # padding satisfies ELU(0) == 0.
    return conv2d_raw(x, w, b, (sh, sw), (dh, dw), elu_alpha=elu_alpha)


def apply_sconvtr2d(x, p, elu_alpha=None):
    wt, b = p["w"], p["b"]                 # (Cin, Cout, kh, kw)
    sh, sw = p["stride"]
    Cin, Cout, kh, kw = wt.shape
    x = x.astype(jnp.bfloat16)
    B, C, H, W = x.shape

    if kh % sh == 0 and kw % sw == 0:
        # Stride-phase (sub-pixel) decomposition: sh*sw small stride-1 convs on the
        # NON-upsampled input, then depth-to-space interleave.  Same result as the
        # zero-upsampled full conv, at 1/(sh*sw) the FLOPs/HBM reads.
        Mh, Mw = kh // sh, kw // sw
        Ah, Aw = H + Mh - 1, W + Mw - 1
        xp = jnp.pad(x, ((0, 0), (0, 0), (Mh - 1, Mh - 1), (Mw - 1, Mw - 1)))
        phase_outs = []
        for ph in range(sh):
            for qw in range(sw):
                w_pq = jnp.flip(wt[:, :, ph::sh, qw::sw], axis=(2, 3)).transpose(1, 0, 2, 3)
                # ELU(0) == 0, so fusing the ELU prologue past zero padding is exact.
                phase_outs.append(conv2d_raw(xp, w_pq, b, elu_alpha=elu_alpha))
        y = jnp.stack(phase_outs, axis=0).reshape(sh, sw, B, Cout, Ah, Aw)
        y = y.transpose(2, 3, 4, 0, 5, 1).reshape(B, Cout, Ah * sh, Aw * sw)
    else:
        # Fallback: zero-upsample + full conv with flipped weights.
        up = jnp.zeros((B, C, (H - 1) * sh + 1, (W - 1) * sw + 1), x.dtype)
        up = up.at[:, :, ::sh, ::sw].set(x)
        up = _pad_axis(up, 2, kh - 1, kh - 1, "zero")
        up = _pad_axis(up, 3, kw - 1, kw - 1, "zero")
        w_eq = jnp.flip(wt, axis=(2, 3)).transpose(1, 0, 2, 3)
        y = conv2d_raw(up, w_eq, b, elu_alpha=elu_alpha)

    for axis, (k, s) in zip((2, 3), ((kh, sh), (kw, sw))):
        padding_total = k - s
        pad_r = padding_total // 2
        pad_l = padding_total - pad_r
        y = jax.lax.slice_in_dim(y, pad_l, y.shape[axis] - pad_r, axis=axis)
    return y


def apply_resblock(x, p):
    a = p["alpha"]
    h = apply_sconv2d(x, p["conv1"], elu_alpha=a)     # ELU(x) fused into conv1 prologue
    h = apply_sconv2d(h, p["conv2"], elu_alpha=a)     # ELU between convs fused into conv2
    sc = x if p["shortcut"] is None else apply_sconv2d(x, p["shortcut"])
    return sc + h


def apply_layers(x, layers):
    pending_elu = None          # standalone ELU fused into the next conv's prologue
    for p in layers:
        k = p["kind"]
        if k == "elu":
            pending_elu = p["alpha"]
            continue
        if k == "conv":
            x = apply_sconv2d(x, p, elu_alpha=pending_elu)
        elif k == "convtr":
            x = apply_sconvtr2d(x, p, elu_alpha=pending_elu)
        else:
            if pending_elu is not None:
                x = pallas_elu(x, pending_elu)
            if k == "resblock":
                x = apply_resblock(x, p)
            elif k == "lstm":
                x = apply_slstm(x, p)
        pending_elu = None
    if pending_elu is not None:
        x = pallas_elu(x, pending_elu)
    return x


# ----------------------------------------------------------------------------
# Deterministic parameter construction (mirrors SEANetEncoder2d/Decoder2d + RVQ)
# ----------------------------------------------------------------------------

class ParamGen:
    def __init__(self, key):
        self._key = key

    def take(self):
        self._key, k = jax.random.split(self._key)
        return k

    def normal(self, shape, scale):
        return scale * jax.random.normal(self.take(), shape, jnp.float32)


def make_conv(pg, cin, cout, kernel, stride=(1, 1), dilation=(1, 1), pad_mode="reflect"):
    kh, kw = kernel
    fan_in = cin * kh * kw
    # weight_norm at init reproduces the raw weight -> plain tensor is equivalent.
    return {"kind": "conv",
            "w": pg.normal((cout, cin, kh, kw), 1.0 / math.sqrt(fan_in)),
            "b": pg.normal((cout,), 0.01),
            "stride": stride, "dilation": dilation, "pad_mode": pad_mode}


def make_convtr(pg, cin, cout, kernel, stride):
    kh, kw = kernel
    fan_in = cin * kh * kw
    return {"kind": "convtr",
            "w": pg.normal((cin, cout, kh, kw), 1.0 / math.sqrt(fan_in)),
            "b": pg.normal((cout,), 0.01),
            "stride": stride}


def make_resblock(pg, dim, rk, dilation, compress, true_skip, alpha, pad_mode):
    hidden = dim // compress
    return {"kind": "resblock", "alpha": alpha,
            "conv1": make_conv(pg, dim, hidden, (rk, rk), dilation=(1, dilation), pad_mode=pad_mode),
            "conv2": make_conv(pg, hidden, dim, (1, 1), pad_mode=pad_mode),
            "shortcut": None if true_skip else make_conv(pg, dim, dim, (1, 1), pad_mode=pad_mode)}


def make_lstm(pg, dim, num_layers, skip=True):
    layers = []
    for _ in range(num_layers):
        layers.append({"w_ih": pg.normal((4 * dim, dim), 1.0 / math.sqrt(dim)),
                       "w_hh": pg.normal((4 * dim, dim), 1.0 / math.sqrt(dim)),
                       "b_ih": pg.normal((4 * dim,), 0.01),
                       "b_hh": pg.normal((4 * dim,), 0.01)})
    return {"kind": "lstm", "layers": layers, "skip": skip}


def build_encoder(pg, cfg):
    a, pm, nf = cfg["activation_alpha"], cfg["pad_mode"], cfg["n_filters"]
    ratios = list(reversed(cfg["ratios"]))
    mult = 1
    layers = [make_conv(pg, cfg["channels"], mult * nf, (cfg["kernel_size"],) * 2, pad_mode=pm)]
    for fr, tr in ratios:
        for j in range(cfg["n_residual_layers"]):
            layers.append(make_resblock(pg, mult * nf, cfg["residual_kernel_size"],
                                        cfg["dilation_base"] ** j, cfg["compress"],
                                        cfg["true_skip"], a, pm))
        layers.append({"kind": "elu", "alpha": a})
        layers.append(make_conv(pg, mult * nf, mult * nf * 2, (fr * 2, tr * 2),
                                stride=(fr, tr), pad_mode=pm))
        mult *= 2
    if cfg["lstm"]:
        layers.append(make_lstm(pg, mult * nf, cfg["lstm"]))
    layers.append({"kind": "elu", "alpha": a})
    layers.append(make_conv(pg, mult * nf, cfg["hidden_dim"], (cfg["last_kernel_size"],) * 2, pad_mode=pm))
    return layers


def build_decoder(pg, cfg):
    a, pm, nf = cfg["activation_alpha"], cfg["pad_mode"], cfg["n_filters"]
    ratios = cfg["ratios"]
    mult = 2 ** len(ratios)
    layers = [make_conv(pg, cfg["hidden_dim"], mult * nf, (cfg["kernel_size"],) * 2, pad_mode=pm)]
    if cfg["lstm"]:
        layers.append(make_lstm(pg, mult * nf, cfg["lstm"]))
    for fr, tr in ratios:
        layers.append({"kind": "elu", "alpha": a})
        layers.append(make_convtr(pg, mult * nf, mult * nf // 2, (fr * 2, tr * 2), (fr, tr)))
        for j in range(cfg["n_residual_layers"]):
            layers.append(make_resblock(pg, mult * nf // 2, cfg["residual_kernel_size"],
                                        cfg["dilation_base"] ** j, cfg["compress"],
                                        cfg["true_skip"], a, pm))
        mult //= 2
    layers.append({"kind": "elu", "alpha": a})
    layers.append(make_conv(pg, nf, cfg["channels"], (cfg["last_kernel_size"],) * 2, pad_mode=pm))
    return layers


def build_quantizer(pg, cfg):
    qs = []
    for _ in range(cfg["n_q"]):
        qs.append({"proj_in_w": pg.normal((cfg["codebook_dim"], cfg["hidden_dim"]),
                                          1.0 / math.sqrt(cfg["hidden_dim"])),
                   "proj_in_b": pg.normal((cfg["codebook_dim"],), 0.01),
                   "proj_out_w": pg.normal((cfg["hidden_dim"], cfg["codebook_dim"]),
                                           1.0 / math.sqrt(cfg["codebook_dim"])),
                   "proj_out_b": pg.normal((cfg["hidden_dim"],), 0.01),
                   "codebook": pg.normal((cfg["bins"], cfg["codebook_dim"]), 1.0)})
    return qs


# ----------------------------------------------------------------------------
# Residual Vector Quantizer + generator forward
# ----------------------------------------------------------------------------

def rvq_forward(quantizers, x, frame_rate, bandwidth, bins):
    # TODO(synk): k-means init / EMA codebook updates / quantizer dropout are
    # training-time statefulness with no clean Pallas equivalent; eval-path VQ only.
    B, D, T = x.shape
    bw_per_q = math.log2(bins) * frame_rate / 1000.0
    n_q = min(len(quantizers), int(max(1, math.floor(bandwidth / bw_per_q))))
    flat = x.transpose(0, 2, 1).reshape(B * T, D)
    # All n_q stages + losses in a single fused kernel (no per-stage HBM trips).
    quantized_flat, commit_loss, quantization_loss = pallas_rvq(flat, quantizers[:n_q])
    # TODO(synk): exact FunCodec quantization-loss weighting not reproduced; L1+L2 vs encoder_out used.
    q_out = quantized_flat.reshape(B, T, D).transpose(0, 2, 1)
    return q_out, commit_loss, quantization_loss


def funcodec_generator_forward(params, cfg, x, use_dual_decoder=False):
    # codec_domain=('time','time'), audio_normalize=False:
    #   time_to_freq_transfer / freq_to_time_transfer are identity, scale=None.
    # TODO(synk): STFT / mel / mag codec-domain transforms (torchaudio) not implemented.
    enc4 = apply_layers(x, params["encoder"])                 # (B, hidden, F'=1, T')
    B, C, Fq, Tq = enc4.shape
    encoder_out = enc4.reshape(B, C * Fq, Tq)                 # (B, hidden, T')
    bw = cfg["target_bandwidths"][random.randint(0, len(cfg["target_bandwidths"]) - 1)]
    quantized, commit_loss, quantization_loss = rvq_forward(
        params["quantizer"], encoder_out, cfg["frame_rate"], bw, cfg["bins"])
    dec_in = quantized.reshape(B, C, Fq, Tq)
    resyn_audio = apply_layers(dec_in, params["decoder"])[:, :, :, : x.shape[3]]
    resyn_audio = resyn_audio.astype(jnp.float32)             # final audio in f32
    if use_dual_decoder:
        resyn_audio_real = apply_layers(enc4, params["decoder"]).astype(jnp.float32)
    else:
        resyn_audio_real = None
    return resyn_audio, commit_loss, quantization_loss, resyn_audio_real


# ----------------------------------------------------------------------------
# Main
# ----------------------------------------------------------------------------

if __name__ == "__main__":
    random.seed(0)

    cfg = dict(
        sample_rate=16000,
        hidden_dim=16,
        codebook_dim=4,
        channels=1,
        n_filters=4,
        n_residual_layers=1,
        ratios=[(2, 1), (2, 2)],           # (freq_ratio, time_ratio) per stage
        activation_alpha=1.0,
        kernel_size=3,
        residual_kernel_size=3,
        last_kernel_size=3,
        dilation_base=2,
        pad_mode="reflect",
        true_skip=False,
        compress=2,
        lstm=2,
        n_q=4,
        bins=64,
        target_bandwidths=[24.0, 48.0],
    )
    cfg["frame_rate"] = math.ceil(cfg["sample_rate"] / int(np.prod(cfg["ratios"])))

    pg = ParamGen(jax.random.PRNGKey(0))
    params = {
        "encoder": build_encoder(pg, cfg),
        "quantizer": build_quantizer(pg, cfg),
        "decoder": build_decoder(pg, cfg),
    }

    # x viewed as (B, C=1, F, T); freq downsample 4, time downsample 2 -> enc (2,16,1,8)
    x = jax.random.normal(jax.random.PRNGKey(0), (2, 1, 4, 16), jnp.float32)

    resyn, commit_loss, quant_loss, resyn_real = funcodec_generator_forward(params, cfg, x)
    jax.block_until_ready(resyn)
    jax.block_until_ready(commit_loss)
    jax.block_until_ready(quant_loss)

    assert resyn.shape == (2, 1, 4, 16), resyn.shape
    assert resyn_real is None
    assert np.isfinite(np.asarray(resyn)).all()
    assert np.isfinite(float(commit_loss)) and np.isfinite(float(quant_loss))
    print("KERNEL_OK")
</pallas_src>

<mosaic_0001>
module attributes {stable_mosaic.version = 11 : i64} {
  func.func @_mm_kernel(%arg0: i32, %arg1: i32, %arg2: i32, %arg3: memref<128x128xbf16, #tpu.memory_space<vmem>>, %arg4: memref<128x128xbf16, #tpu.memory_space<vmem>>, %arg5: memref<1x128xf32, #tpu.memory_space<vmem>>, %arg6: memref<128x128xbf16, #tpu.memory_space<vmem>>, %arg7: memref<128x128xf32, #tpu.memory_space<vmem>>) attributes {dimension_semantics = [#tpu.dimension_semantics<parallel>, #tpu.dimension_semantics<parallel>, #tpu.dimension_semantics<arbitrary>], iteration_bounds = array<i64: 1, 1, 1>, scalar_prefetch = 0 : i64, scratch_operands = 1 : i64, tpu.core_type = #tpu.core_type<tc>, window_params = [{transform_indices = @transform_0, window_bounds = array<i64: 128, 128>}, {transform_indices = @transform_1, window_bounds = array<i64: 128, 128>}, {transform_indices = @transform_2, window_bounds = array<i64: 1, 128>}, {transform_indices = @transform_3, window_bounds = array<i64: 128, 128>}]} {
    %c0_i32 = arith.constant 0 : i32
    %0 = arith.cmpi eq, %arg2, %c0_i32 : i32
    %1 = arith.extui %0 : i1 to i32
    %c0_i32_0 = arith.constant 0 : i32
    %2 = arith.cmpi ne, %1, %c0_i32_0 : i32
    scf.if %2 {
      %cst_10 = arith.constant 0.000000e+00 : f32
      %12 = vector.broadcast %cst_10 : f32 to vector<128x128xf32>
      %c0_11 = arith.constant 0 : index
      %c0_12 = arith.constant 0 : index
      %13 = vector.load %arg7[%c0_11, %c0_12] : memref<128x128xf32, #tpu.memory_space<vmem>>, vector<128x128xf32>
      tpu.vector_store %arg7[%c0_11, %c0_12], %12 {strides = array<i32>} : memref<128x128xf32, #tpu.memory_space<vmem>>, vector<128x128xf32>,
    } else {
    }
    %c0 = arith.constant 0 : index
    %c0_1 = arith.constant 0 : index
    %3 = vector.load %arg3[%c0, %c0_1] : memref<128x128xbf16, #tpu.memory_space<vmem>>, vector<128x128xbf16>
    %c0_2 = arith.constant 0 : index
    %c0_3 = arith.constant 0 : index
    %4 = vector.load %arg7[%c0_2, %c0_3] : memref<128x128xf32, #tpu.memory_space<vmem>>, vector<128x128xf32>
    %c0_4 = arith.constant 0 : index
    %c0_5 = arith.constant 0 : index
    %5 = vector.load %arg4[%c0_4, %c0_5] : memref<128x128xbf16, #tpu.memory_space<vmem>>, vector<128x128xbf16>
    %cst = arith.constant dense<0.000000e+00> : vector<128x128xf32>
    %6 = tpu.matmul %3, %5, %cst {dimension_numbers = #tpu.dot_dimension_numbers<[1], [0], [0], [1], [0, 0, 1, 1], [], []>} : vector<128x128xbf16>, vector<128x128xbf16>, vector<128x128xf32> -> vector<128x128xf32>
    %7 = arith.addf %4, %6 : vector<128x128xf32>
    %c0_6 = arith.constant 0 : index
    %c0_7 = arith.constant 0 : index
    %8 = vector.load %arg7[%c0_6, %c0_7] : memref<128x128xf32, #tpu.memory_space<vmem>>, vector<128x128xf32>
    tpu.vector_store %arg7[%c0_6, %c0_7], %7 {strides = array<i32>} : memref<128x128xf32, #tpu.memory_space<vmem>>, vector<128x128xf32>,
    %c0_i32_8 = arith.constant 0 : i32
    %9 = arith.cmpi eq, %arg2, %c0_i32_8 : i32
    %10 = arith.extui %9 : i1 to i32
    %c0_i32_9 = arith.constant 0 : i32
    %11 = arith.cmpi ne, %10, %c0_i32_9 : i32
    scf.if %11 {
      %c0_10 = arith.constant 0 : index
      %c0_11 = arith.constant 0 : index
      %12 = vector.load %arg7[%c0_10, %c0_11] : memref<128x128xf32, #tpu.memory_space<vmem>>, vector<128x128xf32>
      %c0_12 = arith.constant 0 : index
      %c0_13 = arith.constant 0 : index
      %13 = vector.load %arg5[%c0_12, %c0_13] : memref<1x128xf32, #tpu.memory_space<vmem>>, vector<1x128xf32>
      %14 = vector.broadcast %13 : vector<1x128xf32> to vector<128x128xf32>
      %15 = arith.addf %12, %14 : vector<128x128xf32>
      %16 = arith.truncf %15 : vector<128x128xf32> to vector<128x128xbf16>
      %c0_14 = arith.constant 0 : index
      %c0_15 = arith.constant 0 : index
      %17 = vector.load %arg6[%c0_14, %c0_15] : memref<128x128xbf16, #tpu.memory_space<vmem>>, vector<128x128xbf16>
      tpu.vector_store %arg6[%c0_14, %c0_15], %16 {strides = array<i32>} : memref<128x128xbf16, #tpu.memory_space<vmem>>, vector<128x128xbf16>,
    } else {
    }
    return
  }
  func.func @transform_0(%arg0: i32, %arg1: i32, %arg2: i32) -> (i32, i32) {
    %c0_i32 = arith.constant 0 : i32
    return %arg0, %arg2 : i32, i32
  }
  func.func @transform_1(%arg0: i32, %arg1: i32, %arg2: i32) -> (i32, i32) {
    %c0_i32 = arith.constant 0 : i32
    return %arg2, %arg1 : i32, i32
  }
  func.func @transform_2(%arg0: i32, %arg1: i32, %arg2: i32) -> (i32, i32) {
    %c0_i32 = arith.constant 0 : i32
    %c0_i32_0 = arith.constant 0 : i32
    return %c0_i32, %arg1 : i32, i32
  }
  func.func @transform_3(%arg0: i32, %arg1: i32, %arg2: i32) -> (i32, i32) {
    %c0_i32 = arith.constant 0 : i32
    return %arg0, %arg1 : i32, i32
  }
}

</mosaic_0001>

<llo_original>
// kernel: tpu_custom_call.1
$region0: #{tpu_custom_call.1}
  #allocation0 [shape = 'u32[]', space=smem, size = 0x4, offset = 0x4, fixed_abs, tag = 'smem constant byte address 0x4 - core index']
  #allocation1 [shape = 'u32[72,128]{1,0:T(1,128)}', space=vmem, size = 0x9000, scoped, tag = 'internal scratch']
  #allocation2 [shape = 'f32[128,128]{1,0:T(8,128)}', space=vmem, size = 0x10000, scoped, tag = 'scratch operand']
  %s0 = inlined_call_operand.hbm [shape: bf16[128,128], index: 0, kind: input, shape index: {}]
  %s1 = inlined_call_operand.hbm [shape: bf16[128,128], index: 1, kind: input, shape index: {}]
  %s2 = inlined_call_operand.vmem [shape: f32[1,128], index: 2, kind: input, shape index: {}]
  %s3 = inlined_call_operand.hbm [shape: bf16[128,128], index: 3, kind: output, shape index: {}]
  %s4 = sld [smem:[#allocation0]]
  $region38: #{tpu_custom_call.1} parent=0
    _
  %s6 = ssub.s32 1, %s4
  %s7 = scalar_select 0, %s6, %s4
  $region1: #{tpu_custom_call.1} parent=0
    #allocation3 [shape = 'u8[32768]{0}', space=vmem, size = 0x8000, scoped, tag = 'input window, operand 0, single buffered']
    #allocation4 [shape = 's32[1]{0}', space=sflag, size = 0x4, scoped, tag = 'scoped memory for tpu_custom_call.1']
    #allocation5 [shape = 's32[1]{0}', space=sflag, size = 0x4, scoped, tag = 'scoped memory for tpu_custom_call.1']
    #allocation6 [shape = 'u8[32768]{0}', space=vmem, size = 0x8000, scoped, tag = 'input window, operand 1, single buffered']
    #allocation7 [shape = 's32[1]{0}', space=sflag, size = 0x4, scoped, tag = 'scoped memory for tpu_custom_call.1']
    #allocation8 [shape = 'u8[32768]{0}', space=vmem, size = 0x8000, scoped, tag = 'output window, operand 0, single buffered']
    %8 = vsyncpa [#allocation4], 0
    %9 = vsyncpa [#allocation7], 0
    %10 = vsyncpa [#allocation5], 0
    // Predicated region
    $region2: #{tpu_custom_call.1} parent=1 // pred_check
      _
    $region3: #{tpu_custom_call.1} parent=1 // pred_check_branch
      %12 = sbr.rel (0) target = $region5
    $region4: #{tpu_custom_call.1} parent=1 // pred_region
      %14 = vsyncadd [#allocation4], 0
      %s15 = sshll.u32 %s0, 4
      %s16 = int_to_ptr.hbm [resolvable:$true] %s15
      %s17 = sshll.u32 [#allocation3], 4
      %s18 = int_to_ptr.vmem [resolvable:$true] %s17
      %23 = dma.hbm_to_vmem [thread:$0]  %s16, 1024, %s18, [#allocation4], 64, 64, 4
    $region5: #{tpu_custom_call.1} parent=1 // pred_fallthru
      _
    // Predicated region
    $region6: #{tpu_custom_call.1} parent=1 // pred_check
      _
    $region7: #{tpu_custom_call.1} parent=1 // pred_check_branch
      %25 = sbr.rel (0) target = $region9
    $region8: #{tpu_custom_call.1} parent=1 // pred_region
      %27 = vsyncadd [#allocation7], 0
      %s28 = sshll.u32 %s1, 4
      %s29 = int_to_ptr.hbm [resolvable:$true] %s28
      %s30 = sshll.u32 [#allocation6], 4
      %s31 = int_to_ptr.vmem [resolvable:$true] %s30
      %36 = dma.hbm_to_vmem [thread:$0]  %s29, 1024, %s31, [#allocation7], 64, 64, 4
    $region9: #{tpu_custom_call.1} parent=1 // pred_fallthru
      _
    // Predicated region
    $region10: #{tpu_custom_call.1} parent=1 // pred_check
      _
    $region11: #{tpu_custom_call.1} parent=1 // pred_check_branch
      %38 = sbr.rel (0) target = $region13
    $region12: #{tpu_custom_call.1} parent=1 // pred_region
      _
    $region13: #{tpu_custom_call.1} parent=1 // pred_fallthru
      _
    // Predicated region
    $region14: #{tpu_custom_call.1} parent=1 // pred_check
      _
    $region15: #{tpu_custom_call.1} parent=1 // pred_check_branch
      %40 = sbr.rel (0) target = $region17
    $region16: #{tpu_custom_call.1} parent=1 // pred_region
      %42 = dma.done [#allocation4], 1024
    $region17: #{tpu_custom_call.1} parent=1 // pred_fallthru
      _
    // Predicated region
    $region18: #{tpu_custom_call.1} parent=1 // pred_check
      _
    $region19: #{tpu_custom_call.1} parent=1 // pred_check_branch
      %44 = sbr.rel (0) target = $region21
    $region20: #{tpu_custom_call.1} parent=1 // pred_region
      %46 = dma.done [#allocation7], 1024
    $region21: #{tpu_custom_call.1} parent=1 // pred_fallthru
      _
    %p47 = scmp.eq.s32.totalorder 0, 0
    // Predicated region
    $region22: #{tpu_custom_call.1} parent=1 // pred_check
      %p48 = pneg %p47
    $region23: #{tpu_custom_call.1} parent=1 // pred_check_branch
      %50 = sbr.rel (%p48) target = $region25
    $region24: #{tpu_custom_call.1} parent=1 // pred_region
      %51 = vst [vmem:[#allocation2] sm:$0xff] 0.0
      %52 = vst [vmem:[#allocation2 + $0x8] sm:$0xff] 0.0
      %53 = vst [vmem:[#allocation2 + $0x10] sm:$0xff] 0.0
      %54 = vst [vmem:[#allocation2 + $0x18] sm:$0xff] 0.0
      %55 = vst [vmem:[#allocation2 + $0x20] sm:$0xff] 0.0
      %56 = vst [vmem:[#allocation2 + $0x28] sm:$0xff] 0.0
      %57 = vst [vmem:[#allocation2 + $0x30] sm:$0xff] 0.0
      %58 = vst [vmem:[#allocation2 + $0x38] sm:$0xff] 0.0
      %59 = vst [vmem:[#allocation2 + $0x40] sm:$0xff] 0.0
      %60 = vst [vmem:[#allocation2 + $0x48] sm:$0xff] 0.0
      %61 = vst [vmem:[#allocation2 + $0x50] sm:$0xff] 0.0
      %62 = vst [vmem:[#allocation2 + $0x58] sm:$0xff] 0.0
      %63 = vst [vmem:[#allocation2 + $0x60] sm:$0xff] 0.0
      %64 = vst [vmem:[#allocation2 + $0x68] sm:$0xff] 0.0
      %65 = vst [vmem:[#allocation2 + $0x70] sm:$0xff] 0.0
      %66 = vst [vmem:[#allocation2 + $0x78] sm:$0xff] 0.0
    $region25: #{tpu_custom_call.1} parent=1 // pred_fallthru
      _
    %v67 = vld [vmem:[#allocation3] sm:$0xf]
    %v68 = vld [vmem:[#allocation3 + $0x4] sm:$0xf]
    %v69 = vld [vmem:[#allocation3 + $0x8] sm:$0xf]
    %v70 = vld [vmem:[#allocation3 + $0xc] sm:$0xf]
    %v71 = vld [vmem:[#allocation3 + $0x10] sm:$0xf]
    %v72 = vld [vmem:[#allocation3 + $0x14] sm:$0xf]
    %v73 = vld [vmem:[#allocation3 + $0x18] sm:$0xf]
    %v74 = vld [vmem:[#allocation3 + $0x1c] sm:$0xf]
    %v75 = vld [vmem:[#allocation3 + $0x20] sm:$0xf]
    %v76 = vld [vmem:[#allocation3 + $0x24] sm:$0xf]
    %v77 = vld [vmem:[#allocation3 + $0x28] sm:$0xf]
    %v78 = vld [vmem:[#allocation3 + $0x2c] sm:$0xf]
    %v79 = vld [vmem:[#allocation3 + $0x30] sm:$0xf]
    %v80 = vld [vmem:[#allocation3 + $0x34] sm:$0xf]
    %v81 = vld [vmem:[#allocation3 + $0x38] sm:$0xf]
    %v82 = vld [vmem:[#allocation3 + $0x3c] sm:$0xf]
    %v83 = vld [vmem:[#allocation2] sm:$0xff]
    %v84 = vld [vmem:[#allocation2 + $0x8] sm:$0xff]
    %v85 = vld [vmem:[#allocation2 + $0x10] sm:$0xff]
    %v86 = vld [vmem:[#allocation2 + $0x18] sm:$0xff]
    %v87 = vld [vmem:[#allocation2 + $0x20] sm:$0xff]
    %v88 = vld [vmem:[#allocation2 + $0x28] sm:$0xff]
    %v89 = vld [vmem:[#allocation2 + $0x30] sm:$0xff]
    %v90 = vld [vmem:[#allocation2 + $0x38] sm:$0xff]
    %v91 = vld [vmem:[#allocation2 + $0x40] sm:$0xff]
    %v92 = vld [vmem:[#allocation2 + $0x48] sm:$0xff]
    %v93 = vld [vmem:[#allocation2 + $0x50] sm:$0xff]
    %v94 = vld [vmem:[#allocation2 + $0x58] sm:$0xff]
    %v95 = vld [vmem:[#allocation2 + $0x60] sm:$0xff]
    %v96 = vld [vmem:[#allocation2 + $0x68] sm:$0xff]
    %v97 = vld [vmem:[#allocation2 + $0x70] sm:$0xff]
    %v98 = vld [vmem:[#allocation2 + $0x78] sm:$0xff]
    %v99 = vld [vmem:[#allocation6] sm:$0xf]
    %v100 = vld [vmem:[#allocation6 + $0x4] sm:$0xf]
    %v101 = vld [vmem:[#allocation6 + $0x8] sm:$0xf]
    %v102 = vld [vmem:[#allocation6 + $0xc] sm:$0xf]
    %v103 = vld [vmem:[#allocation6 + $0x10] sm:$0xf]
    %v104 = vld [vmem:[#allocation6 + $0x14] sm:$0xf]
    %v105 = vld [vmem:[#allocation6 + $0x18] sm:$0xf]
    %v106 = vld [vmem:[#allocation6 + $0x1c] sm:$0xf]
    %v107 = vld [vmem:[#allocation6 + $0x20] sm:$0xf]
    %v108 = vld [vmem:[#allocation6 + $0x24] sm:$0xf]
    %v109 = vld [vmem:[#allocation6 + $0x28] sm:$0xf]
    %v110 = vld [vmem:[#allocation6 + $0x2c] sm:$0xf]
    %v111 = vld [vmem:[#allocation6 + $0x30] sm:$0xf]
    %v112 = vld [vmem:[#allocation6 + $0x34] sm:$0xf]
    %v113 = vld [vmem:[#allocation6 + $0x38] sm:$0xf]
    %v114 = vld [vmem:[#allocation6 + $0x3c] sm:$0xf]
    %v131 = vunpack.c.l.b16 %v67
    %v132 = vunpack.c.l.b16 %v68
    %v133 = vunpack.c.l.b16 %v69
    %v134 = vunpack.c.l.b16 %v70
    %v135 = vunpack.c.l.b16 %v71
    %v136 = vunpack.c.l.b16 %v72
    %v137 = vunpack.c.l.b16 %v73
    %v138 = vunpack.c.l.b16 %v74
    %v139 = vunpack.c.l.b16 %v75
    %v140 = vunpack.c.l.b16 %v76
    %v141 = vunpack.c.l.b16 %v77
    %v142 = vunpack.c.l.b16 %v78
    %v143 = vunpack.c.l.b16 %v79
    %v144 = vunpack.c.l.b16 %v80
    %v145 = vunpack.c.l.b16 %v81
    %v146 = vunpack.c.l.b16 %v82
    %v147 = vpack.c.b16 %v132, %v131
    %v148 = vpack.c.b16 %v134, %v133
    %v149 = vpack.c.b16 %v136, %v135
    %v150 = vpack.c.b16 %v138, %v137
    %v151 = vpack.c.b16 %v140, %v139
    %v152 = vpack.c.b16 %v142, %v141
    %v153 = vpack.c.b16 %v144, %v143
    %v154 = vpack.c.b16 %v146, %v145
    %v179 = vunpack.c.l.b16 %v99
    %v180 = vunpack.c.l.b16 %v100
    %v181 = vunpack.c.l.b16 %v101
    %v182 = vunpack.c.l.b16 %v102
    %v183 = vunpack.c.l.b16 %v103
    %v184 = vunpack.c.l.b16 %v104
    %v185 = vunpack.c.l.b16 %v105
    %v186 = vunpack.c.l.b16 %v106
    %v187 = vunpack.c.l.b16 %v107
    %v188 = vunpack.c.l.b16 %v108
    %v189 = vunpack.c.l.b16 %v109
    %v190 = vunpack.c.l.b16 %v110
    %v191 = vunpack.c.l.b16 %v111
    %v192 = vunpack.c.l.b16 %v112
    %v193 = vunpack.c.l.b16 %v113
    %v194 = vunpack.c.l.b16 %v114
    %v195 = vpack.c.b16 %v180, %v179
    %v196 = vpack.c.b16 %v182, %v181
    %v197 = vpack.c.b16 %v184, %v183
    %v198 = vpack.c.b16 %v186, %v185
    %v199 = vpack.c.b16 %v188, %v187
    %v200 = vpack.c.b16 %v190, %v189
    %v201 = vpack.c.b16 %v192, %v191
    %v202 = vpack.c.b16 %v194, %v193
    %211 = vmatpush.bf16.msra.mxu0 %v202
    %212 = vmatpush.bf16.msra.mxu0 %v201
    %213 = vmatpush.bf16.msra.mxu0 %v200
    %214 = vmatpush.bf16.msra.mxu0 %v199
    %215 = vmatpush.bf16.msra.mxu0 %v198
    %216 = vmatpush.bf16.msra.mxu0 %v197
    %217 = vmatpush.bf16.msra.mxu0 %v196
    %218 = vmatpush.bf16.msra.mxu0 %v195
    %219 = vmatmul.bf16.gmra.mxu0 %v147
    %v220 = vpop.f32.mrf.mxu0
    %v221 = vadd.f32 0.0, %v220
    %v222 = vpop.f32.mrf.mxu0
    %v223 = vadd.f32 0.0, %v222
    %224 = vmatmul.bf16.gmra.mxu0 %v148
    %v225 = vpop.f32.mrf.mxu0
    %v226 = vadd.f32 0.0, %v225
    %v227 = vpop.f32.mrf.mxu0
    %v228 = vadd.f32 0.0, %v227
    %229 = vmatmul.bf16.gmra.mxu0 %v149
    %v230 = vpop.f32.mrf.mxu0
    %v231 = vadd.f32 0.0, %v230
    %v232 = vpop.f32.mrf.mxu0
    %v233 = vadd.f32 0.0, %v232
    %234 = vmatmul.bf16.gmra.mxu0 %v150
    %v235 = vpop.f32.mrf.mxu0
    %v236 = vadd.f32 0.0, %v235
    %v237 = vpop.f32.mrf.mxu0
    %v238 = vadd.f32 0.0, %v237
    %239 = vmatmul.bf16.gmra.mxu0 %v151
    %v240 = vpop.f32.mrf.mxu0
    %v241 = vadd.f32 0.0, %v240
    %v242 = vpop.f32.mrf.mxu0
    %v243 = vadd.f32 0.0, %v242
    %244 = vmatmul.bf16.gmra.mxu0 %v152
    %v245 = vpop.f32.mrf.mxu0
    %v246 = vadd.f32 0.0, %v245
    %v247 = vpop.f32.mrf.mxu0
    %v248 = vadd.f32 0.0, %v247
    %249 = vmatmul.bf16.gmra.mxu0 %v153
    %v250 = vpop.f32.mrf.mxu0
    %v251 = vadd.f32 0.0, %v250
    %v252 = vpop.f32.mrf.mxu0
    %v253 = vadd.f32 0.0, %v252
    %254 = vmatmul.bf16.gmra.mxu0 %v154
    %v255 = vpop.f32.mrf.mxu0
    %v256 = vadd.f32 0.0, %v255
    %v257 = vpop.f32.mrf.mxu0
    %v258 = vadd.f32 0.0, %v257
    %259 = vdwg.mxu0
    %v260 = vadd.f32 %v83, %v221
    %v261 = vadd.f32 %v84, %v223
    %v262 = vadd.f32 %v85, %v226
    %v263 = vadd.f32 %v86, %v228
    %v264 = vadd.f32 %v87, %v231
    %v265 = vadd.f32 %v88, %v233
    %v266 = vadd.f32 %v89, %v236
    %v267 = vadd.f32 %v90, %v238
    %v268 = vadd.f32 %v91, %v241
    %v269 = vadd.f32 %v92, %v243
    %v270 = vadd.f32 %v93, %v246
    %v271 = vadd.f32 %v94, %v248
    %v272 = vadd.f32 %v95, %v251
    %v273 = vadd.f32 %v96, %v253
    %v274 = vadd.f32 %v97, %v256
    %v275 = vadd.f32 %v98, %v258
    %276 = vst [vmem:[#allocation2] sm:$0xff] %v260
    %277 = vst [vmem:[#allocation2 + $0x8] sm:$0xff] %v261
    %278 = vst [vmem:[#allocation2 + $0x10] sm:$0xff] %v262
    %279 = vst [vmem:[#allocation2 + $0x18] sm:$0xff] %v263
    %280 = vst [vmem:[#allocation2 + $0x20] sm:$0xff] %v264
    %281 = vst [vmem:[#allocation2 + $0x28] sm:$0xff] %v265
    %282 = vst [vmem:[#allocation2 + $0x30] sm:$0xff] %v266
    %283 = vst [vmem:[#allocation2 + $0x38] sm:$0xff] %v267
    %284 = vst [vmem:[#allocation2 + $0x40] sm:$0xff] %v268
    %285 = vst [vmem:[#allocation2 + $0x48] sm:$0xff] %v269
    %286 = vst [vmem:[#allocation2 + $0x50] sm:$0xff] %v270
    %287 = vst [vmem:[#allocation2 + $0x58] sm:$0xff] %v271
    %288 = vst [vmem:[#allocation2 + $0x60] sm:$0xff] %v272
    %289 = vst [vmem:[#allocation2 + $0x68] sm:$0xff] %v273
    %290 = vst [vmem:[#allocation2 + $0x70] sm:$0xff] %v274
    %291 = vst [vmem:[#allocation2 + $0x78] sm:$0xff] %v275
    // Predicated region
    $region26: #{tpu_custom_call.1} parent=1 // pred_check
      %p292 = pneg %p47
    $region27: #{tpu_custom_call.1} parent=1 // pred_check_branch
      %294 = sbr.rel (%p292) target = $region29
    $region28: #{tpu_custom_call.1} parent=1 // pred_region
      %v295 = vld [vmem:[#allocation2] sm:$0xff]
      %v296 = vld [vmem:[#allocation2 + $0x8] sm:$0xff]
      %v297 = vld [vmem:[#allocation2 + $0x10] sm:$0xff]
      %v298 = vld [vmem:[#allocation2 + $0x18] sm:$0xff]
      %v299 = vld [vmem:[#allocation2 + $0x20] sm:$0xff]
      %v300 = vld [vmem:[#allocation2 + $0x28] sm:$0xff]
      %v301 = vld [vmem:[#allocation2 + $0x30] sm:$0xff]
      %v302 = vld [vmem:[#allocation2 + $0x38] sm:$0xff]
      %v303 = vld [vmem:[#allocation2 + $0x40] sm:$0xff]
      %v304 = vld [vmem:[#allocation2 + $0x48] sm:$0xff]
      %v305 = vld [vmem:[#allocation2 + $0x50] sm:$0xff]
      %v306 = vld [vmem:[#allocation2 + $0x58] sm:$0xff]
      %v307 = vld [vmem:[#allocation2 + $0x60] sm:$0xff]
      %v308 = vld [vmem:[#allocation2 + $0x68] sm:$0xff]
      %v309 = vld [vmem:[#allocation2 + $0x70] sm:$0xff]
      %v310 = vld [vmem:[#allocation2 + $0x78] sm:$0xff]
      %v311 = vld [vmem:[%s2] sm:$0x1]
      %v313 = vperm.slane %v311, 0
      %v315 = vadd.f32 %v295, %v313
      %v316 = vadd.f32 %v296, %v313
      %v317 = vadd.f32 %v297, %v313
      %v318 = vadd.f32 %v298, %v313
      %v319 = vadd.f32 %v299, %v313
      %v320 = vadd.f32 %v300, %v313
      %v321 = vadd.f32 %v301, %v313
      %v322 = vadd.f32 %v302, %v313
      %v323 = vadd.f32 %v303, %v313
      %v324 = vadd.f32 %v304, %v313
      %v325 = vadd.f32 %v305, %v313
      %v326 = vadd.f32 %v306, %v313
      %v327 = vadd.f32 %v307, %v313
      %v328 = vadd.f32 %v308, %v313
      %v329 = vadd.f32 %v309, %v313
      %v330 = vadd.f32 %v310, %v313
      %v331 = vpack.c.bf16 %v315, %v315
      %v332 = vpack.c.bf16 %v316, %v316
      %v333 = vpack.c.bf16 %v317, %v317
      %v334 = vpack.c.bf16 %v318, %v318
      %v335 = vpack.c.bf16 %v319, %v319
      %v336 = vpack.c.bf16 %v320, %v320
      %v337 = vpack.c.bf16 %v321, %v321
      %v338 = vpack.c.bf16 %v322, %v322
      %v339 = vpack.c.bf16 %v323, %v323
      %v340 = vpack.c.bf16 %v324, %v324
      %v341 = vpack.c.bf16 %v325, %v325
      %v342 = vpack.c.bf16 %v326, %v326
      %v343 = vpack.c.bf16 %v327, %v327
      %v344 = vpack.c.bf16 %v328, %v328
      %v345 = vpack.c.bf16 %v329, %v329
      %v346 = vpack.c.bf16 %v330, %v330
      %347 = vst [vmem:[#allocation8] sm:$0xf] %v331
      %348 = vst [vmem:[#allocation8 + $0x4] sm:$0xf] %v332
      %349 = vst [vmem:[#allocation8 + $0x8] sm:$0xf] %v333
      %350 = vst [vmem:[#allocation8 + $0xc] sm:$0xf] %v334
      %351 = vst [vmem:[#allocation8 + $0x10] sm:$0xf] %v335
      %352 = vst [vmem:[#allocation8 + $0x14] sm:$0xf] %v336
      %353 = vst [vmem:[#allocation8 + $0x18] sm:$0xf] %v337
      %354 = vst [vmem:[#allocation8 + $0x1c] sm:$0xf] %v338
      %355 = vst [vmem:[#allocation8 + $0x20] sm:$0xf] %v339
      %356 = vst [vmem:[#allocation8 + $0x24] sm:$0xf] %v340
      %357 = vst [vmem:[#allocation8 + $0x28] sm:$0xf] %v341
      %358 = vst [vmem:[#allocation8 + $0x2c] sm:$0xf] %v342
      %359 = vst [vmem:[#allocation8 + $0x30] sm:$0xf] %v343
      %360 = vst [vmem:[#allocation8 + $0x34] sm:$0xf] %v344
      %361 = vst [vmem:[#allocation8 + $0x38] sm:$0xf] %v345
      %362 = vst [vmem:[#allocation8 + $0x3c] sm:$0xf] %v346
    $region29: #{tpu_custom_call.1} parent=1 // pred_fallthru
      _
    // Predicated region
    $region30: #{tpu_custom_call.1} parent=1 // pred_check
      _
    $region31: #{tpu_custom_call.1} parent=1 // pred_check_branch
      %364 = sbr.rel (0) target = $region33
    $region32: #{tpu_custom_call.1} parent=1 // pred_region
      %366 = vsyncadd [#allocation5], 0
      %s367 = sshll.u32 [#allocation8], 4
      %s368 = int_to_ptr.vmem [resolvable:$true] %s367
      %s369 = sshll.u32 %s3, 4
      %s370 = int_to_ptr.hbm [resolvable:$true] %s369
      %375 = dma.vmem_to_hbm [thread:$0]  %s368, 1024, %s370, [#allocation5], 64, 64, 4
    $region33: #{tpu_custom_call.1} parent=1 // pred_fallthru
      _
    // Predicated region
    $region34: #{tpu_custom_call.1} parent=1 // pred_check
      _
    $region35: #{tpu_custom_call.1} parent=1 // pred_check_branch
      %377 = sbr.rel (0) target = $region37
    $region36: #{tpu_custom_call.1} parent=1 // pred_region
      %379 = dma.done [#allocation5], 1024
    $region37: #{tpu_custom_call.1} parent=1 // pred_fallthru
      _
    %380 = vsyncpa [#allocation4], 1
    %381 = vsyncpa [#allocation7], 1
    %382 = vsyncpa [#allocation5], 1

</llo_original>
